<compile_context>
chip_gen: v5e
topology: v5e:2x2
jax: 0.10.0
libtpu: 0.0.40
codegen_flags: <defaults>
</compile_context>

<pallas_src>
import functools

import jax
import jax.numpy as jnp
from jax.experimental import pallas as pl
from jax.experimental.pallas import tpu as pltpu


def _gram_mse_kernel(feat_ref, tgt_ref, g_ref, loss_ref, acc_ref, *,
                     inv_norm, inv_mse):
    """Accumulate features @ features.T over K-chunks; finalize G and MSE loss."""
    k = pl.program_id(0)

    @pl.when(k == 0)
    def _init():
        acc_ref[...] = jnp.zeros_like(acc_ref)

    f = feat_ref[...].astype(jnp.float32)          # (Mp, tk), lane-dense
    # f @ f.T for this K-chunk on the MXU, accumulated in f32 VMEM scratch.
    acc_ref[...] += jax.lax.dot_general(
        f, f,
        dimension_numbers=(((1,), (1,)), ((), ())),
        preferred_element_type=jnp.float32,
    )

    @pl.when(k == pl.num_programs(0) - 1)
    def _finalize():
        # Fused divide: G = acc * (1 / (a*b*c*d))  -- single scalar multiply.
        g = acc_ref[...] * inv_norm
        g_ref[...] = g.astype(g_ref.dtype)
        diff = g - tgt_ref[...]
        # MSE over the (unpadded) M*M elements; padded rows/cols are zero in
        # both G and target so they contribute nothing to the sum.
        loss_ref[0, 0] = jnp.sum(diff * diff) * inv_mse


def _gram_and_mse(features, target_g, *, norm_elems, mse_elems, tk_max=2048):
    """features: (M, K) f32-castable.  target_g: (M, M).  Returns (G, loss)."""
    M, K = features.shape

    # Pad to TPU-friendly tiles: sublane multiple of 8, lane multiple of 128.
    Mp = ((M + 7) // 8) * 8
    tk = min(tk_max, ((K + 127) // 128) * 128)     # big, lane-aligned K chunks
    Kp = ((K + tk - 1) // tk) * tk

    feat = features.astype(jnp.float32)
    if (Mp, Kp) != (M, K):
        feat = jnp.pad(feat, ((0, Mp - M), (0, Kp - K)))
    tgt = target_g.astype(jnp.float32)
    if Mp != M:
        tgt = jnp.pad(tgt, ((0, Mp - M), (0, Mp - M)))

    kernel = functools.partial(
        _gram_mse_kernel,
        inv_norm=1.0 / float(norm_elems),
        inv_mse=1.0 / float(mse_elems),
    )

    g_pad, loss = pl.pallas_call(
        kernel,
        out_shape=(
            jax.ShapeDtypeStruct((Mp, Mp), jnp.float32),
            jax.ShapeDtypeStruct((1, 1), jnp.float32),
        ),
        grid=(Kp // tk,),
        in_specs=[
            pl.BlockSpec((Mp, tk), lambda k: (0, k)),       # feature K-chunk
            pl.BlockSpec((Mp, Mp), lambda k: (0, 0)),       # target Gram
        ],
        out_specs=(
            pl.BlockSpec((Mp, Mp), lambda k: (0, 0)),       # G (resident)
            pl.BlockSpec((1, 1), lambda k: (0, 0), memory_space=pltpu.SMEM),
        ),
        scratch_shapes=[pltpu.VMEM((Mp, Mp), jnp.float32)], # f32 accumulator
        compiler_params=pltpu.CompilerParams(
            dimension_semantics=("arbitrary",)),            # K is a reduction
    )(feat, tgt)

    return g_pad[:M, :M], loss[0, 0]


def gram_matrix(x):
    """Pallas gram_matrix: (N, C, H, W) -> (N*C, N*C), divided by N*C*H*W."""
    N, C, H, W = x.shape
    feats = x.reshape(N * C, H * W)
    g, _ = _gram_and_mse(
        feats,
        jnp.zeros((N * C, N * C), jnp.float32),
        norm_elems=N * C * H * W,
        mse_elems=(N * C) * (N * C),
    )
    return g


class StyleLoss:
    """Mirror of the PyTorch StyleLoss module: forward returns the input and
    records the MSE between its Gram matrix and the target Gram matrix."""

    def __init__(self, target_feature):
        self.target = gram_matrix(target_feature)
        self.loss = None

    def __call__(self, x):
        N, C, H, W = x.shape
        feats = x.reshape(N * C, H * W)
        _, loss = _gram_and_mse(
            feats,
            self.target,
            norm_elems=N * C * H * W,
            mse_elems=(N * C) * (N * C),
        )
        self.loss = loss
        return x  # forward returns its input unchanged (PyTorch semantics)


if __name__ == "__main__":
    key = jax.random.PRNGKey(0)
    k1, k2 = jax.random.split(key)

    # Small shapes consistent with the module: batch=2, channels=4, spatial=16.
    N, C, H, W = 2, 4, 16, 16
    target_feature = jax.random.uniform(k1, (N, C, H, W), dtype=jnp.float32)
    x = jax.random.uniform(k2, (N, C, H, W), dtype=jnp.float32)

    module = StyleLoss(target_feature)
    out = module(x)
    out, loss, target_g = jax.block_until_ready((out, module.loss, module.target))

    # Reference (pure JAX, mirrors PyTorch exactly).
    def gram_ref(t):
        f = t.reshape(N * C, H * W)
        return (f @ f.T) / (N * C * H * W)

    tg_ref = gram_ref(target_feature)
    g_ref = gram_ref(x)
    loss_ref = jnp.mean((g_ref - tg_ref) ** 2)

    assert out.shape == x.shape and out.dtype == x.dtype
    assert jnp.array_equal(out, x)                       # forward returns input
    assert jnp.allclose(target_g, tg_ref, atol=1e-3, rtol=1e-3)
    assert abs(float(loss) - float(loss_ref)) <= 1e-6 + 1e-2 * abs(float(loss_ref))

    print("KERNEL_OK")
</pallas_src>

<mosaic_0001>
module attributes {stable_mosaic.version = 11 : i64} {
  func.func @_gram_mse_kernel(%arg0: i32, %arg1: memref<8x256xf32, #tpu.memory_space<vmem>>, %arg2: memref<8x8xf32, #tpu.memory_space<vmem>>, %arg3: memref<8x8xf32, #tpu.memory_space<vmem>>, %arg4: memref<1x1xf32, #tpu.memory_space<smem>>, %arg5: memref<8x8xf32, #tpu.memory_space<vmem>>) attributes {dimension_semantics = [#tpu.dimension_semantics<arbitrary>], iteration_bounds = array<i64: 1>, scalar_prefetch = 0 : i64, scratch_operands = 1 : i64, tpu.core_type = #tpu.core_type<tc>, window_params = [{transform_indices = @transform_0, window_bounds = array<i64: 8, 256>}, {pipeline_mode = #tpu.pipeline_mode<synchronous>, transform_indices = @transform_1, window_bounds = array<i64: 8, 8>}, {pipeline_mode = #tpu.pipeline_mode<synchronous>, transform_indices = @transform_2, window_bounds = array<i64: 8, 8>}, {transform_indices = @transform_3, window_bounds = array<i64: 1, 1>}]} {
    %c0_i32 = arith.constant 0 : i32
    %0 = arith.cmpi eq, %arg0, %c0_i32 : i32
    %1 = arith.extui %0 : i1 to i32
    %c0_i32_0 = arith.constant 0 : i32
    %2 = arith.cmpi ne, %1, %c0_i32_0 : i32
    scf.if %2 {
      %cst_8 = arith.constant 0.000000e+00 : f32
      %11 = vector.broadcast %cst_8 : f32 to vector<8x8xf32>
      %c0_9 = arith.constant 0 : index
      %c0_10 = arith.constant 0 : index
      %12 = vector.load %arg5[%c0_9, %c0_10] : memref<8x8xf32, #tpu.memory_space<vmem>>, vector<8x8xf32>
      tpu.vector_store %arg5[%c0_9, %c0_10], %11 {strides = array<i32>} : memref<8x8xf32, #tpu.memory_space<vmem>>, vector<8x8xf32>,
    } else {
    }
    %c0 = arith.constant 0 : index
    %c0_1 = arith.constant 0 : index
    %3 = vector.load %arg1[%c0, %c0_1] : memref<8x256xf32, #tpu.memory_space<vmem>>, vector<8x256xf32>
    %c0_2 = arith.constant 0 : index
    %c0_3 = arith.constant 0 : index
    %4 = vector.load %arg5[%c0_2, %c0_3] : memref<8x8xf32, #tpu.memory_space<vmem>>, vector<8x8xf32>
    %cst = arith.constant dense<0.000000e+00> : vector<8x8xf32>
    %5 = tpu.matmul %3, %3, %cst {dimension_numbers = #tpu.dot_dimension_numbers<[1], [1], [0], [0], [0, 0, 1, 0], [], []>} : vector<8x256xf32>, vector<8x256xf32>, vector<8x8xf32> -> vector<8x8xf32>
    %6 = arith.addf %4, %5 : vector<8x8xf32>
    %c0_4 = arith.constant 0 : index
    %c0_5 = arith.constant 0 : index
    %7 = vector.load %arg5[%c0_4, %c0_5] : memref<8x8xf32, #tpu.memory_space<vmem>>, vector<8x8xf32>
    tpu.vector_store %arg5[%c0_4, %c0_5], %6 {strides = array<i32>} : memref<8x8xf32, #tpu.memory_space<vmem>>, vector<8x8xf32>,
    %c0_i32_6 = arith.constant 0 : i32
    %8 = arith.cmpi eq, %arg0, %c0_i32_6 : i32
    %9 = arith.extui %8 : i1 to i32
    %c0_i32_7 = arith.constant 0 : i32
    %10 = arith.cmpi ne, %9, %c0_i32_7 : i32
    scf.if %10 {
      %c0_8 = arith.constant 0 : index
      %c0_9 = arith.constant 0 : index
      %11 = vector.load %arg5[%c0_8, %c0_9] : memref<8x8xf32, #tpu.memory_space<vmem>>, vector<8x8xf32>
      %cst_10 = arith.constant 4.8828125E-4 : f32
      %12 = vector.broadcast %cst_10 : f32 to vector<8x8xf32>
      %13 = arith.mulf %11, %12 : vector<8x8xf32>
      %c0_11 = arith.constant 0 : index
      %c0_12 = arith.constant 0 : index
      %14 = vector.load %arg3[%c0_11, %c0_12] : memref<8x8xf32, #tpu.memory_space<vmem>>, vector<8x8xf32>
      tpu.vector_store %arg3[%c0_11, %c0_12], %13 {strides = array<i32>} : memref<8x8xf32, #tpu.memory_space<vmem>>, vector<8x8xf32>,
      %c0_13 = arith.constant 0 : index
      %c0_14 = arith.constant 0 : index
      %15 = vector.load %arg2[%c0_13, %c0_14] : memref<8x8xf32, #tpu.memory_space<vmem>>, vector<8x8xf32>
      %16 = arith.subf %13, %15 : vector<8x8xf32>
      %17 = arith.mulf %16, %16 : vector<8x8xf32>
      %18 = vector.shape_cast %17 : vector<8x8xf32> to vector<1x8x8xf32>
      %cst_15 = arith.constant dense<0.000000e+00> : vector<1xf32>
      %19 = vector.multi_reduction <add>, %18, %cst_15 [1, 2] : vector<1x8x8xf32> to vector<1xf32>
      %20 = vector.shape_cast %19 : vector<1xf32> to vector<1x1x1xf32>
      %21 = vector.extract %20[0, 0, 0] : f32 from vector<1x1x1xf32>
      %cst_16 = arith.constant 1.562500e-02 : f32
      %22 = arith.mulf %21, %cst_16 : f32
      %c0_17 = arith.constant 0 : index
      %c0_18 = arith.constant 0 : index
      %23 = memref.load %arg4[%c0_17, %c0_18] : memref<1x1xf32, #tpu.memory_space<smem>>
      memref.store %22, %arg4[%c0_17, %c0_18] : memref<1x1xf32, #tpu.memory_space<smem>>
    } else {
    }
    return
  }
  func.func @transform_0(%arg0: i32) -> (i32, i32) {
    %c0_i32 = arith.constant 0 : i32
    %c0_i32_0 = arith.constant 0 : i32
    return %c0_i32, %arg0 : i32, i32
  }
  func.func @transform_1(%arg0: i32) -> (i32, i32) {
    %c0_i32 = arith.constant 0 : i32
    %c0_i32_0 = arith.constant 0 : i32
    %c0_i32_1 = arith.constant 0 : i32
    return %c0_i32, %c0_i32_0 : i32, i32
  }
  func.func @transform_2(%arg0: i32) -> (i32, i32) {
    %c0_i32 = arith.constant 0 : i32
    %c0_i32_0 = arith.constant 0 : i32
    %c0_i32_1 = arith.constant 0 : i32
    return %c0_i32, %c0_i32_0 : i32, i32
  }
  func.func @transform_3(%arg0: i32) -> (i32, i32) {
    %c0_i32 = arith.constant 0 : i32
    %c0_i32_0 = arith.constant 0 : i32
    %c0_i32_1 = arith.constant 0 : i32
    return %c0_i32, %c0_i32_0 : i32, i32
  }
}

</mosaic_0001>

<llo_original>
// kernel: tpu_custom_call.1
$region0: #{tpu_custom_call.1}
  #allocation0 [shape = 'u32[]', space=smem, size = 0x4, offset = 0x4, fixed_abs, tag = 'smem constant byte address 0x4 - core index']
  #allocation1 [shape = 'u32[72,128]{1,0:T(1,128)}', space=vmem, size = 0x9000, scoped, tag = 'internal scratch']
  #allocation2 [shape = 'f32[8,8]{1,0:T(8,128)}', space=vmem, size = 0x1000, scoped, tag = 'scratch operand']
  %s0 = inlined_call_operand.hbm [shape: f32[8,256], index: 0, kind: input, shape index: {}]
  %s1 = inlined_call_operand.hbm [shape: f32[8,8], index: 1, kind: input, shape index: {}]
  %s2 = inlined_call_operand.hbm [shape: f32[8,8], index: 2, kind: output, shape index: {0}]
  %s3 = inlined_call_operand.hbm [shape: f32[1,1], index: 3, kind: output, shape index: {1}]
  %4 = xla_tuple %s2, %s3
  %s5 = sld [smem:[#allocation0]]
  $region42: #{tpu_custom_call.1} parent=0
    _
  %s7 = ssub.s32 1, %s5
  %s8 = scalar_select 0, %s7, %s5
  $region1: #{tpu_custom_call.1} parent=0
    #allocation3 [shape = 'u8[8192]{0}', space=vmem, size = 0x2000, scoped, tag = 'input window, operand 0, single buffered']
    #allocation4 [shape = 's32[1]{0}', space=sflag, size = 0x4, scoped, tag = 'scoped memory for tpu_custom_call.1']
    #allocation5 [shape = 's32[1]{0}', space=sflag, size = 0x4, scoped, tag = 'scoped memory for tpu_custom_call.1']
    #allocation6 [shape = 's32[1]{0}', space=sflag, size = 0x4, scoped, tag = 'scoped memory for tpu_custom_call.1']
    #allocation7 [shape = 'u8[4096]{0}', space=vmem, size = 0x1000, scoped, tag = 'input window, operand 1, single buffered']
    #allocation8 [shape = 's32[1]{0}', space=sflag, size = 0x4, scoped, tag = 'scoped memory for tpu_custom_call.1']
    #allocation9 [shape = 'u8[4096]{0}', space=vmem, size = 0x1000, scoped, tag = 'output window, operand 0, single buffered']
    #allocation10 [shape = 'u8[512]{0}', space=smem, size = 0x200, scoped, tag = 'output window, operand 1, single buffered']
    %9 = vsyncpa [#allocation4], 0
    %10 = vsyncpa [#allocation8], 0
    %11 = vsyncpa [#allocation5], 0
    %12 = vsyncpa [#allocation6], 0
    // Predicated region
    $region2: #{tpu_custom_call.1} parent=1 // pred_check
      _
    $region3: #{tpu_custom_call.1} parent=1 // pred_check_branch
      %14 = sbr.rel (0) target = $region5
    $region4: #{tpu_custom_call.1} parent=1 // pred_region
      %16 = vsyncadd [#allocation4], 0
      %s18 = sshll.u32 %s0, 4
      %s19 = int_to_ptr.hbm [resolvable:$true] %s18
      %s20 = sshll.u32 [#allocation3], 4
      %s21 = int_to_ptr.vmem [resolvable:$true] %s20
      %23 = dma.hbm_to_vmem [thread:$0]  %s19, 256, %s21, [#allocation4]
    $region5: #{tpu_custom_call.1} parent=1 // pred_fallthru
      _
    // Predicated region
    $region6: #{tpu_custom_call.1} parent=1 // pred_check
      _
    $region7: #{tpu_custom_call.1} parent=1 // pred_check_branch
      %25 = sbr.rel (0) target = $region9
    $region8: #{tpu_custom_call.1} parent=1 // pred_region
      %27 = vsyncadd [#allocation8], 0
      %s29 = sshll.u32 %s1, 4
      %s30 = int_to_ptr.hbm [resolvable:$true] %s29
      %s31 = sshll.u32 [#allocation7], 4
      %s32 = int_to_ptr.vmem [resolvable:$true] %s31
      %34 = dma.hbm_to_vmem [thread:$0]  %s30, 128, %s32, [#allocation8]
    $region9: #{tpu_custom_call.1} parent=1 // pred_fallthru
      _
    // Predicated region
    $region10: #{tpu_custom_call.1} parent=1 // pred_check
      _
    $region11: #{tpu_custom_call.1} parent=1 // pred_check_branch
      %36 = sbr.rel (0) target = $region13
    $region12: #{tpu_custom_call.1} parent=1 // pred_region
      %38 = dma.done [#allocation4], 256
    $region13: #{tpu_custom_call.1} parent=1 // pred_fallthru
      _
    // Predicated region
    $region14: #{tpu_custom_call.1} parent=1 // pred_check
      _
    $region15: #{tpu_custom_call.1} parent=1 // pred_check_branch
      %40 = sbr.rel (0) target = $region17
    $region16: #{tpu_custom_call.1} parent=1 // pred_region
      %42 = dma.done [#allocation8], 128
    $region17: #{tpu_custom_call.1} parent=1 // pred_fallthru
      _
    %p43 = scmp.eq.s32.totalorder 0, 0
    // Predicated region
    $region18: #{tpu_custom_call.1} parent=1 // pred_check
      %p44 = pneg %p43
    $region19: #{tpu_custom_call.1} parent=1 // pred_check_branch
      %46 = sbr.rel (%p44) target = $region21
    $region20: #{tpu_custom_call.1} parent=1 // pred_region
      %vm47 = vcmask 64512
      %48 = vst.msk [vmem:[#allocation2] sm:$0xff] %vm47, 0.0
    $region21: #{tpu_custom_call.1} parent=1 // pred_fallthru
      _
    %v49 = vld [vmem:[#allocation3] sm:$0xff]
    %v50 = vld [vmem:[#allocation3 + $0x8] sm:$0xff]
    %v51 = vld [vmem:[#allocation2] sm:$0xff]
    %52 = vmatpush.xpose.msra.mxu0 0.0
    %53 = vmatpush.xpose.msra.mxu0 0.0
    %54 = vmatpush.xpose.msra.mxu0 0.0
    %55 = vmatpush.xpose.msra.mxu0 0.0
    %56 = vmatpush.xpose.msra.mxu0 0.0
    %57 = vmatpush.xpose.msra.mxu0 0.0
    %58 = vmatpush.xpose.msra.mxu0 0.0
    %59 = vmatpush.xpose.msra.mxu0 0.0
    %60 = vmatpush.xpose.msra.mxu0 0.0
    %61 = vmatpush.xpose.msra.mxu0 0.0
    %62 = vmatpush.xpose.msra.mxu0 0.0
    %63 = vmatpush.xpose.msra.mxu0 0.0
    %64 = vmatpush.xpose.msra.mxu0 0.0
    %65 = vmatpush.xpose.msra.mxu0 0.0
    %66 = vmatpush.xpose.msra.mxu0 0.0
    %67 = vmatpush.xpose.msra.mxu0 %v49
    %68 = vmatmul.f32.gmra.mxu0 %v49
    %v69 = vpop.f32.mrf.mxu0
    %v70 = vadd.f32 0.0, %v69
    %71 = vdwg.mxu0
    %72 = vmatpush.xpose.msra.mxu0 0.0
    %73 = vmatpush.xpose.msra.mxu0 0.0
    %74 = vmatpush.xpose.msra.mxu0 0.0
    %75 = vmatpush.xpose.msra.mxu0 0.0
    %76 = vmatpush.xpose.msra.mxu0 0.0
    %77 = vmatpush.xpose.msra.mxu0 0.0
    %78 = vmatpush.xpose.msra.mxu0 0.0
    %79 = vmatpush.xpose.msra.mxu0 0.0
    %80 = vmatpush.xpose.msra.mxu0 0.0
    %81 = vmatpush.xpose.msra.mxu0 0.0
    %82 = vmatpush.xpose.msra.mxu0 0.0
    %83 = vmatpush.xpose.msra.mxu0 0.0
    %84 = vmatpush.xpose.msra.mxu0 0.0
    %85 = vmatpush.xpose.msra.mxu0 0.0
    %86 = vmatpush.xpose.msra.mxu0 0.0
    %87 = vmatpush.xpose.msra.mxu0 %v50
    %88 = vmatmul.f32.gmra.mxu0 %v50
    %v89 = vpop.f32.mrf.mxu0
    %v90 = vadd.f32 %v70, %v89
    %91 = vdwg.mxu0
    %v92 = vadd.f32 %v51, %v90
    %vm93 = vcmask 64512
    %94 = vst.msk [vmem:[#allocation2] sm:$0xff] %vm93, %v92
    // Predicated region
    $region22: #{tpu_custom_call.1} parent=1 // pred_check
      %p95 = pneg %p43
    $region23: #{tpu_custom_call.1} parent=1 // pred_check_branch
      %97 = sbr.rel (%p95) target = $region25
    $region24: #{tpu_custom_call.1} parent=1 // pred_region
      %v98 = vld [vmem:[#allocation2] sm:$0xff]
      %v99 = vmul.f32 %v98, 0.00048828125
      %100 = vst.msk [vmem:[#allocation9] sm:$0xff] %vm93, %v99
      %v101 = vld [vmem:[#allocation7] sm:$0xff]
      %v102 = vsub.f32 %v99, %v101
      %v103 = vmul.f32 %v102, %v102
      %v104 = vsel %vm93, %v103, 0.0
      %105 = vadd.xlane.f32.xlu0 %v104
      %v106 = vpop.xlane.xlu0 %105
      %v107 = vrot.slane %v106, 4
      %v108 = vadd.f32 %v106, %v107
      %v109 = vrot.slane %v108, 2
      %v110 = vadd.f32 %v108, %v109
      %v111 = vrot.slane %v110, 1
      %v112 = vadd.f32 %v110, %v111
      %s113 = vtos %v112
      %s114 = smul.f32 %s113, 0.015625
      %s115 = scalar_lea.smem [#allocation10], 0
      %116 = sst [smem:[%s115]] %s114
    $region25: #{tpu_custom_call.1} parent=1 // pred_fallthru
      _
    // Predicated region
    $region26: #{tpu_custom_call.1} parent=1 // pred_check
      _
    $region27: #{tpu_custom_call.1} parent=1 // pred_check_branch
      %118 = sbr.rel (0) target = $region29
    $region28: #{tpu_custom_call.1} parent=1 // pred_region
      %120 = vsyncadd [#allocation5], 0
      %s122 = sshll.u32 [#allocation9], 4
      %s123 = int_to_ptr.vmem [resolvable:$true] %s122
      %s124 = sshll.u32 %s2, 4
      %s125 = int_to_ptr.hbm [resolvable:$true] %s124
      %127 = dma.vmem_to_hbm [thread:$0]  %s123, 128, %s125, [#allocation5]
    $region29: #{tpu_custom_call.1} parent=1 // pred_fallthru
      _
    // Predicated region
    $region30: #{tpu_custom_call.1} parent=1 // pred_check
      _
    $region31: #{tpu_custom_call.1} parent=1 // pred_check_branch
      %129 = sbr.rel (0) target = $region33
    $region32: #{tpu_custom_call.1} parent=1 // pred_region
      %131 = vsyncadd [#allocation6], 0
      %s133 = sshll.u32 %s3, 4
      %s134 = int_to_ptr.hbm [resolvable:$true] %s133
      %136 = dma.smem_to_hbm [#allocation10], 16, %s134, [#allocation6]
    $region33: #{tpu_custom_call.1} parent=1 // pred_fallthru
      _
    // Predicated region
    $region34: #{tpu_custom_call.1} parent=1 // pred_check
      _
    $region35: #{tpu_custom_call.1} parent=1 // pred_check_branch
      %138 = sbr.rel (0) target = $region37
    $region36: #{tpu_custom_call.1} parent=1 // pred_region
      %140 = dma.done [#allocation5], 128
    $region37: #{tpu_custom_call.1} parent=1 // pred_fallthru
      _
    // Predicated region
    $region38: #{tpu_custom_call.1} parent=1 // pred_check
      _
    $region39: #{tpu_custom_call.1} parent=1 // pred_check_branch
      %142 = sbr.rel (0) target = $region41
    $region40: #{tpu_custom_call.1} parent=1 // pred_region
      %144 = dma.done [#allocation6], 16
    $region41: #{tpu_custom_call.1} parent=1 // pred_fallthru
      _
    %145 = sfence
    %146 = vsyncpa [#allocation4], 1
    %147 = vsyncpa [#allocation8], 1
    %148 = vsyncpa [#allocation5], 1
    %149 = vsyncpa [#allocation6], 1

</llo_original>
